<compile_context>
chip_gen: v7x
topology: tpu7x:2x2x1
jax: 0.10.0
libtpu: 0.0.40
codegen_flags: <defaults>
</compile_context>

<pallas_src>
import jax
import jax.numpy as jnp
from jax.experimental import pallas as pl
from jax.experimental.pallas import tpu as pltpu


def _round_up(v, m):
    return (v + m - 1) // m * m


def _segment_sum_kernel(x_ref, batch_ref, o_ref):
    # x_ref:     (TN, TH)  stream-dtype node-feature tile
    # batch_ref: (1, TN)   int32 graph id per node (padded rows carry id == Gp)
    # o_ref:     (Gp, TH)  f32 accumulator, VMEM-resident across the node axis
    i = pl.program_id(1)                      # node-tile axis (reduction, last)

    @pl.when(i == 0)
    def _init():
        o_ref[...] = jnp.zeros_like(o_ref)

    Gp = o_ref.shape[0]
    TN = x_ref.shape[0]
    # One-hot membership (Gp, TN) built directly in the streaming dtype.
    graph_iota = jax.lax.broadcasted_iota(jnp.int32, (Gp, TN), 0)
    onehot = (graph_iota == batch_ref[...]).astype(x_ref.dtype)
    # Segment sum on the MXU with f32 accumulation.
    o_ref[...] += jnp.dot(onehot, x_ref[...], preferred_element_type=jnp.float32)


def pool_module_forward(x, w, b, batch, num_graphs, *,
                        stream_dtype=jnp.bfloat16,
                        target_block_bytes=4 << 20,
                        lane_tile=None,
                        x_buffers=None):
    """PoolModule forward: global_add_pool(Linear(x), batch).

    x: (N, H), w: (H, H) with y = x @ w (pass nn.Linear.weight.T), b: (H,),
    batch: (N,) int32 in [0, num_graphs).  Returns (num_graphs, H) float32.
    lane_tile: set to 128/256 on v7x with H >= 256 to shard lane blocks across
    both TensorCores.  x_buffers: >2 to deepen the x pipeline if DMA is exposed.
    """
    N, H = x.shape
    G = int(num_graphs)

    # --- Lane / sublane alignment --------------------------------------------
    Hp = _round_up(H, 128)                    # lane-align hidden dim
    if lane_tile is None:
        TH = Hp                               # no lane split (single-TC default)
    else:
        TH = _round_up(min(int(lane_tile), Hp), 128)
        Hp = _round_up(Hp, TH)
    n_h = Hp // TH
    Gp = _round_up(max(G, 1), 8)              # sublane-align pooled rows

    # --- Node-tile size from a byte target -----------------------------------
    stream_bytes = jnp.dtype(stream_dtype).itemsize
    tn_target = max(512, min(8192, target_block_bytes // (TH * stream_bytes)))
    TN = _round_up(min(tn_target, max(N, 1)), 128)
    Np = _round_up(N, TN)
    n_tiles = Np // TN

    # --- Pad + cast (skipped when x already conforms) ------------------------
    if x.dtype == stream_dtype and Hp == H and Np == N:
        x_p = x
    else:
        x_p = (jnp.zeros((Np, Hp), stream_dtype)
               .at[:N, :H].set(x.astype(stream_dtype)))
    # Padded nodes get an out-of-range graph id so the one-hot drops them.
    batch_p = jnp.full((1, Np), Gp, jnp.int32).at[0, :N].set(
        batch.astype(jnp.int32))

    # --- VMEM budget (generation-aware cap, padding-aware accounting) --------
    n_buf = 2 if x_buffers is None else int(x_buffers)
    vmem_budget = (
        n_buf * TN * TH * stream_bytes        # x tiles (multi-buffered)
        + n_buf * 8 * TN * 4                  # (1,TN) id tiles pad to 8 sublanes
        + 2 * Gp * TH * 4                     # output accumulator (x2, safe)
    )
    try:
        vmem_cap = int(pltpu.get_tpu_info().vmem_capacity_bytes)
    except Exception:
        vmem_cap = 64 * 1024 * 1024           # conservative (v7x per-TC) fallback
    vmem_limit = int(min(max(2 * vmem_budget, 8 * 1024 * 1024),
                         (3 * vmem_cap) // 4))

    x_spec_kwargs = {}
    if x_buffers is not None and int(x_buffers) != 2:
        x_spec_kwargs["pipeline_mode"] = pl.Buffered(int(x_buffers))
    x_spec = pl.BlockSpec((TN, TH), lambda j, i: (i, j), **x_spec_kwargs)

    pooled = pl.pallas_call(
        _segment_sum_kernel,
        out_shape=jax.ShapeDtypeStruct((Gp, Hp), jnp.float32),
        grid=(n_h, n_tiles),
        in_specs=[
            x_spec,                                       # x tile (streamed)
            pl.BlockSpec((1, TN), lambda j, i: (0, i)),   # graph-id tile
        ],
        # Constant index along the node axis => VMEM-resident accumulator.
        out_specs=pl.BlockSpec((Gp, TH), lambda j, i: (0, j)),
        compiler_params=pltpu.CompilerParams(
            dimension_semantics=("parallel", "arbitrary"),
            vmem_limit_bytes=vmem_limit,
        ),
    )(x_p, batch_p)

    # --- Finalize in the wrapper (tiny, hoisted out of the kernel) -----------
    counts = jnp.zeros((G,), jnp.float32).at[batch].add(1.0)
    out = (pooled[:G, :H] @ w.astype(jnp.float32)
           + counts[:, None] * b.astype(jnp.float32)[None, :])
    return out


if __name__ == "__main__":
    key = jax.random.PRNGKey(0)
    k_x, k_w, k_b = jax.random.split(key, 3)

    N = 16          # total nodes across all graphs in the batch
    H = 32          # hidden dim of node embeddings
    G = 2           # number of graphs (subgraphs) in the batch

    x = jax.random.normal(k_x, (N, H), dtype=jnp.float32)
    w = jax.random.normal(k_w, (H, H), dtype=jnp.float32) * 0.1
    b = jax.random.normal(k_b, (H,), dtype=jnp.float32) * 0.1
    # graph assignment: first 10 nodes -> graph 0, last 6 nodes -> graph 1
    batch = jnp.concatenate(
        [jnp.zeros((10,), jnp.int32), jnp.ones((6,), jnp.int32)])

    out = pool_module_forward(x, w, b, batch, num_graphs=G)
    out = jax.block_until_ready(out)
    assert out.shape == (G, H)

    def segsum(y):
        return jnp.zeros((G, H), jnp.float32).at[batch].add(y)

    # (a) bf16-consistent reference (kernel streams x as bf16) -> tight check.
    x_bf = x.astype(jnp.bfloat16).astype(jnp.float32)
    ref_bf = segsum(x_bf @ w + b[None, :])
    assert jnp.allclose(out, ref_bf, atol=2e-3, rtol=2e-3), float(
        jnp.max(jnp.abs(out - ref_bf)))

    # (b) exact f32 module semantics (Linear then global_add_pool); tolerance
    # reflects bf16 quantization of the streamed node features.
    ref_f32 = segsum(x @ w + b[None, :])
    assert jnp.allclose(out, ref_f32, atol=5e-2, rtol=5e-2), float(
        jnp.max(jnp.abs(out - ref_f32)))

    # (c) f32-streaming fallback matches exact module semantics tightly.
    out_f32 = jax.block_until_ready(
        pool_module_forward(x, w, b, batch, num_graphs=G,
                            stream_dtype=jnp.float32))
    assert jnp.allclose(out_f32, ref_f32, atol=1e-3, rtol=1e-3), float(
        jnp.max(jnp.abs(out_f32 - ref_f32)))

    print("KERNEL_OK")
</pallas_src>

<mosaic_0001>
module attributes {stable_mosaic.version = 11 : i64} {
  func.func @_segment_sum_kernel(%arg0: i32, %arg1: i32, %arg2: memref<128x128xbf16, #tpu.memory_space<vmem>>, %arg3: memref<1x128xi32, #tpu.memory_space<vmem>>, %arg4: memref<8x128xf32, #tpu.memory_space<vmem>>) attributes {dimension_semantics = [#tpu.dimension_semantics<parallel>, #tpu.dimension_semantics<arbitrary>], iteration_bounds = array<i64: 1, 1>, scalar_prefetch = 0 : i64, scratch_operands = 0 : i64, tpu.core_type = #tpu.core_type<tc>, window_params = [{transform_indices = @transform_0, window_bounds = array<i64: 128, 128>}, {transform_indices = @transform_1, window_bounds = array<i64: 1, 128>}, {transform_indices = @transform_2, window_bounds = array<i64: 8, 128>}]} {
    %c0_i32 = arith.constant 0 : i32
    %0 = arith.cmpi eq, %arg1, %c0_i32 : i32
    %1 = arith.extui %0 : i1 to i32
    %c0_i32_0 = arith.constant 0 : i32
    %2 = arith.cmpi ne, %1, %c0_i32_0 : i32
    scf.if %2 {
      %cst_8 = arith.constant 0.000000e+00 : f32
      %15 = vector.broadcast %cst_8 : f32 to vector<8x128xf32>
      %c0_9 = arith.constant 0 : index
      %c0_10 = arith.constant 0 : index
      %16 = vector.load %arg4[%c0_9, %c0_10] : memref<8x128xf32, #tpu.memory_space<vmem>>, vector<8x128xf32>
      tpu.vector_store %arg4[%c0_9, %c0_10], %15 {strides = array<i32>} : memref<8x128xf32, #tpu.memory_space<vmem>>, vector<8x128xf32>,
    } else {
    }
    %3 = tpu.iota {dimensions = array<i32: 0>} : vector<8x128xi32>
    %c0 = arith.constant 0 : index
    %c0_1 = arith.constant 0 : index
    %4 = vector.load %arg3[%c0, %c0_1] : memref<1x128xi32, #tpu.memory_space<vmem>>, vector<1x128xi32>
    %5 = vector.broadcast %4 : vector<1x128xi32> to vector<8x128xi32>
    %6 = arith.cmpi eq, %3, %5 : vector<8x128xi32>
    %7 = arith.extui %6 : vector<8x128xi1> to vector<8x128xi32>
    %8 = arith.sitofp %7 : vector<8x128xi32> to vector<8x128xf32>
    %9 = arith.truncf %8 : vector<8x128xf32> to vector<8x128xbf16>
    %c0_2 = arith.constant 0 : index
    %c0_3 = arith.constant 0 : index
    %10 = vector.load %arg4[%c0_2, %c0_3] : memref<8x128xf32, #tpu.memory_space<vmem>>, vector<8x128xf32>
    %c0_4 = arith.constant 0 : index
    %c0_5 = arith.constant 0 : index
    %11 = vector.load %arg2[%c0_4, %c0_5] : memref<128x128xbf16, #tpu.memory_space<vmem>>, vector<128x128xbf16>
    %cst = arith.constant dense<0.000000e+00> : vector<8x128xf32>
    %12 = tpu.matmul %9, %11, %cst {dimension_numbers = #tpu.dot_dimension_numbers<[1], [0], [0], [1], [0, 0, 1, 1], [], []>} : vector<8x128xbf16>, vector<128x128xbf16>, vector<8x128xf32> -> vector<8x128xf32>
    %13 = arith.addf %10, %12 : vector<8x128xf32>
    %c0_6 = arith.constant 0 : index
    %c0_7 = arith.constant 0 : index
    %14 = vector.load %arg4[%c0_6, %c0_7] : memref<8x128xf32, #tpu.memory_space<vmem>>, vector<8x128xf32>
    tpu.vector_store %arg4[%c0_6, %c0_7], %13 {strides = array<i32>} : memref<8x128xf32, #tpu.memory_space<vmem>>, vector<8x128xf32>,
    return
  }
  func.func @transform_0(%arg0: i32, %arg1: i32) -> (i32, i32) {
    %c0_i32 = arith.constant 0 : i32
    return %arg1, %arg0 : i32, i32
  }
  func.func @transform_1(%arg0: i32, %arg1: i32) -> (i32, i32) {
    %c0_i32 = arith.constant 0 : i32
    %c0_i32_0 = arith.constant 0 : i32
    return %c0_i32, %arg1 : i32, i32
  }
  func.func @transform_2(%arg0: i32, %arg1: i32) -> (i32, i32) {
    %c0_i32 = arith.constant 0 : i32
    %c0_i32_0 = arith.constant 0 : i32
    return %c0_i32, %arg0 : i32, i32
  }
}

</mosaic_0001>

<llo_original>
// kernel: tpu_custom_call.1
$region0: #{tpu_custom_call.1}
  #allocation0 [shape = 'u32[]', space=smem, size = 0x4, offset = 0x4, fixed_abs, tag = 'smem constant byte address 0x4 - core index']
  #allocation1 [shape = 'u32[144,128]{1,0:T(1,128)}', space=vmem, size = 0x12000, scoped, tag = 'internal scratch']
  %s0 = inlined_call_operand.hbm [shape: bf16[128,128], index: 0, kind: input, shape index: {}]
  %s1 = inlined_call_operand.vmem [shape: s32[1,128], index: 1, kind: input, shape index: {}]
  %s2 = inlined_call_operand.hbm [shape: f32[8,128], index: 2, kind: output, shape index: {}]
  %s3 = sld [smem:[#allocation0]]
  $region26: #{tpu_custom_call.1} parent=0
    _
  %s5 = ssub.s32 1, %s3
  %s6 = scalar_select 0, %s5, %s3
  $region1: #{tpu_custom_call.1} parent=0
    #allocation2 [shape = 'u8[32768]{0}', space=vmem, size = 0x8000, scoped, tag = 'input window, operand 0, single buffered']
    #allocation3 [shape = 's32[1]{0}', space=sflag, size = 0x4, scoped, tag = 'scoped memory for tpu_custom_call.1']
    #allocation4 [shape = 's32[1]{0}', space=sflag, size = 0x4, scoped, tag = 'scoped memory for tpu_custom_call.1']
    #allocation5 [shape = 'u8[4096]{0}', space=vmem, size = 0x1000, scoped, tag = 'output window, operand 0, single buffered']
    %7 = vsyncpa [#allocation3], 0
    %8 = vsyncpa [#allocation4], 0
    // Predicated region
    $region2: #{tpu_custom_call.1} parent=1 // pred_check
      _
    $region3: #{tpu_custom_call.1} parent=1 // pred_check_branch
      %10 = sbr.rel (0) target = $region5
    $region4: #{tpu_custom_call.1} parent=1 // pred_region
      %s12 = ssub.s32 1024, 1024
      %13 = vsyncadd [#allocation3], %s12
      %s14 = sshll.u32 [#allocation2], 4
      %s15 = int_to_ptr.vmem [resolvable:$true] %s14
      %20 = dma.hbm_to_vmem [thread:$0]  %s0, 1024, %s15, [#allocation3], 64, 64, 4
    $region5: #{tpu_custom_call.1} parent=1 // pred_fallthru
      _
    // Predicated region
    $region6: #{tpu_custom_call.1} parent=1 // pred_check
      _
    $region7: #{tpu_custom_call.1} parent=1 // pred_check_branch
      %22 = sbr.rel (0) target = $region9
    $region8: #{tpu_custom_call.1} parent=1 // pred_region
      _
    $region9: #{tpu_custom_call.1} parent=1 // pred_fallthru
      _
    // Predicated region
    $region10: #{tpu_custom_call.1} parent=1 // pred_check
      _
    $region11: #{tpu_custom_call.1} parent=1 // pred_check_branch
      %24 = sbr.rel (0) target = $region13
    $region12: #{tpu_custom_call.1} parent=1 // pred_region
      %25 = dma.done [#allocation3], 1024
    $region13: #{tpu_custom_call.1} parent=1 // pred_fallthru
      _
    %p27 = scmp.eq.s32.totalorder 0, 0
    // Predicated region
    $region14: #{tpu_custom_call.1} parent=1 // pred_check
      %p28 = pneg %p27
    $region15: #{tpu_custom_call.1} parent=1 // pred_check_branch
      %30 = sbr.rel (%p28) target = $region17
    $region16: #{tpu_custom_call.1} parent=1 // pred_region
      %31 = vst [vmem:[#allocation5] sm:$0xff] 0.0
    $region17: #{tpu_custom_call.1} parent=1 // pred_fallthru
      _
    %v32 = vlaneseq
    %v33 = vshrl.u32 %v32, 7
    %v34 = vld [vmem:[%s1] sm:$0x1]
    %v35 = vlaneseq
    %v36 = vshrl.u32 %v35, 7
    %v37 = vsub.s32 0, %v36
    %v38 = vrot.slane %v34, %v37
    %vm39 = vcmp.eq.s32.totalorder %v33, %v38
    %v40 = vsel %vm39, 1, 0
    %v41 = vcvt.s32.f32 %v40
    %v42 = vpack.c.bf16 %v41, %v41
    %v43 = vld [vmem:[#allocation5] sm:$0xff]
    %v44 = vld [vmem:[#allocation2] sm:$0xf]
    %v45 = vld [vmem:[#allocation2 + $0x4] sm:$0xf]
    %v46 = vld [vmem:[#allocation2 + $0x8] sm:$0xf]
    %v47 = vld [vmem:[#allocation2 + $0xc] sm:$0xf]
    %v48 = vld [vmem:[#allocation2 + $0x10] sm:$0xf]
    %v49 = vld [vmem:[#allocation2 + $0x14] sm:$0xf]
    %v50 = vld [vmem:[#allocation2 + $0x18] sm:$0xf]
    %v51 = vld [vmem:[#allocation2 + $0x1c] sm:$0xf]
    %v52 = vld [vmem:[#allocation2 + $0x20] sm:$0xf]
    %v53 = vld [vmem:[#allocation2 + $0x24] sm:$0xf]
    %v54 = vld [vmem:[#allocation2 + $0x28] sm:$0xf]
    %v55 = vld [vmem:[#allocation2 + $0x2c] sm:$0xf]
    %v56 = vld [vmem:[#allocation2 + $0x30] sm:$0xf]
    %v57 = vld [vmem:[#allocation2 + $0x34] sm:$0xf]
    %v58 = vld [vmem:[#allocation2 + $0x38] sm:$0xf]
    %v59 = vld [vmem:[#allocation2 + $0x3c] sm:$0xf]
    %v76 = vunpack.c.l.b16 %v44
    %v77 = vunpack.c.l.b16 %v45
    %v78 = vunpack.c.l.b16 %v46
    %v79 = vunpack.c.l.b16 %v47
    %v80 = vunpack.c.l.b16 %v48
    %v81 = vunpack.c.l.b16 %v49
    %v82 = vunpack.c.l.b16 %v50
    %v83 = vunpack.c.l.b16 %v51
    %v84 = vunpack.c.l.b16 %v52
    %v85 = vunpack.c.l.b16 %v53
    %v86 = vunpack.c.l.b16 %v54
    %v87 = vunpack.c.l.b16 %v55
    %v88 = vunpack.c.l.b16 %v56
    %v89 = vunpack.c.l.b16 %v57
    %v90 = vunpack.c.l.b16 %v58
    %v91 = vunpack.c.l.b16 %v59
    %v92 = vpack.c.b16 %v77, %v76
    %v93 = vpack.c.b16 %v79, %v78
    %v94 = vpack.c.b16 %v81, %v80
    %v95 = vpack.c.b16 %v83, %v82
    %v96 = vpack.c.b16 %v85, %v84
    %v97 = vpack.c.b16 %v87, %v86
    %v98 = vpack.c.b16 %v89, %v88
    %v99 = vpack.c.b16 %v91, %v90
    %108 = vmatprep.subr.bf16.mxu0 0
    %109 = vmatpush1.bf16.msra.mxu0 %v92
    %110 = vmatprep.subr.bf16.mxu0 0
    %111 = vmatpush1.bf16.msra.mxu0 %v93
    %112 = vmatprep.subr.bf16.mxu0 0
    %113 = vmatpush1.bf16.msra.mxu0 %v94
    %114 = vmatprep.subr.bf16.mxu0 0
    %115 = vmatpush1.bf16.msra.mxu0 %v95
    %116 = vmatprep.subr.bf16.mxu0 0
    %117 = vmatpush1.bf16.msra.mxu0 %v96
    %118 = vmatprep.subr.bf16.mxu0 0
    %119 = vmatpush1.bf16.msra.mxu0 %v97
    %120 = vmatprep.subr.bf16.mxu0 0
    %121 = vmatpush1.bf16.msra.mxu0 %v98
    %122 = vmatprep.subr.bf16.mxu0 0
    %123 = vmatpush1.bf16.msra.mxu0 %v99
    %124 = vmatprep.subr.bf16.mxu0 0
    %125 = vmatpush1.bf16.msra.mxu0 0
    %126 = vmatprep.subr.bf16.mxu0 0
    %127 = vmatpush1.bf16.msra.mxu0 0
    %128 = vmatprep.subr.bf16.mxu0 0
    %129 = vmatpush1.bf16.msra.mxu0 0
    %130 = vmatprep.subr.bf16.mxu0 0
    %131 = vmatpush1.bf16.msra.mxu0 0
    %132 = vmatprep.subr.bf16.mxu0 0
    %133 = vmatpush1.bf16.msra.mxu0 0
    %134 = vmatprep.subr.bf16.mxu0 0
    %135 = vmatpush1.bf16.msra.mxu0 0
    %136 = vmatprep.subr.bf16.mxu0 0
    %137 = vmatpush1.bf16.msra.mxu0 0
    %138 = vmatprep.subr.bf16.mxu0 0
    %139 = vmatpush1.bf16.msra.mxu0 0
    %140 = vmatprep.mubr.bf16.mxu0 0
    %141 = vmatmul.mubr.bf16.gmra.mrb[0].mxu0 %v42
    %v142 = vpop.f32.mrb[0].mxu0
    %v143 = vadd.f32 0.0, %v142
    %v144 = vpop.f32.mrb[0].mxu0
    %v145 = vpop.f32.mrb[0].mxu0
    %v146 = vpop.f32.mrb[0].mxu0
    %147 = vdwg.mxu0
    %v148 = vadd.f32 %v43, %v143
    %149 = vst [vmem:[#allocation5] sm:$0xff] %v148
    // Predicated region
    $region18: #{tpu_custom_call.1} parent=1 // pred_check
      _
    $region19: #{tpu_custom_call.1} parent=1 // pred_check_branch
      %151 = sbr.rel (0) target = $region21
    $region20: #{tpu_custom_call.1} parent=1 // pred_region
      %s153 = ssub.s32 128, 128
      %154 = vsyncadd [#allocation4], %s153
      %s156 = sshll.u32 [#allocation5], 4
      %s157 = int_to_ptr.vmem [resolvable:$true] %s156
      %159 = dma.vmem_to_hbm [thread:$0]  %s157, 128, %s2, [#allocation4]
    $region21: #{tpu_custom_call.1} parent=1 // pred_fallthru
      _
    // Predicated region
    $region22: #{tpu_custom_call.1} parent=1 // pred_check
      _
    $region23: #{tpu_custom_call.1} parent=1 // pred_check_branch
      %161 = sbr.rel (0) target = $region25
    $region24: #{tpu_custom_call.1} parent=1 // pred_region
      %162 = dma.done [#allocation4], 128
    $region25: #{tpu_custom_call.1} parent=1 // pred_fallthru
      _
    %163 = vsyncpa [#allocation3], 1
    %164 = vsyncpa [#allocation4], 1

</llo_original>
